<compile_context>
chip_gen: v7x
topology: tpu7x:2x2x1
jax: 0.10.0
libtpu: 0.0.40
codegen_flags: <defaults>
</compile_context>

<pallas_src>
import math

import jax
import jax.numpy as jnp
from jax import lax
from jax.experimental import pallas as pl
from jax.experimental.pallas import tpu as pltpu

_LOG_ZERO = -1e30  # finite sentinel for log(0); restored to -inf in the kernel
_LANE = 128
_SUB = 8


def _cdiv(a, b):
    return -(-a // b)


def _round_up(a, b):
    return _cdiv(a, b) * b


def _choose_fold(n_states, max_fold=16):
    """Observations folded per kernel row so G*n_states is a 128-multiple."""
    g = _LANE // math.gcd(n_states, _LANE)
    if g > max_fold:
        # TODO(synk): for awkward n_states (e.g. odd) pad the table's state dim
        # to a 128-multiple instead of falling back to masked HBM stores.
        return 1
    return g


def _gather_log_prob_kernel(key_ref, hi_ref, lo_ref, o_ref):
    # key_ref : (R_tile, G) int32, values in [0, n_obs]; row n_obs = sentinel
    # hi/lo   : (K_pad, n_states) bf16 planes, hi + lo == f32 log table
    # o_ref   : (R_tile, G*n_states) lane-dense output tile
    R, G = key_ref.shape
    K, S = hi_ref.shape

    col = lax.broadcasted_iota(jnp.int32, (R, K), 1)   # hoisted; reused per g
    hi = hi_ref[...]
    lo = lo_ref[...]

    for g in range(G):  # static unroll, G <= 16
        # exact 0/1 one-hot; single bool -> bf16 cast (0 and 1 exact in bf16)
        one_hot = (col == key_ref[:, g:g + 1]).astype(jnp.bfloat16)
        gathered = (jnp.dot(one_hot, hi, preferred_element_type=jnp.float32)
                    + jnp.dot(one_hot, lo, preferred_element_type=jnp.float32))
        # Zero-prob / invalid entries were encoded as _LOG_ZERO so the MXU never
        # sees 0 * (-inf) = NaN; restore exact -inf here (VPU, hidden under DMA).
        gathered = jnp.where(gathered <= _LOG_ZERO * 0.5, -jnp.inf, gathered)
        o_ref[:, g * S:(g + 1) * S] = gathered.astype(o_ref.dtype)


def discrete_emission_log_prob(x, probs, out_dtype=jnp.float32):
    """x: int (...), probs: float (n_obs, n_states) -> out_dtype (..., n_states)."""
    probs = probs.astype(jnp.float32)
    n_obs, n_states = probs.shape
    batch_shape = x.shape
    N = int(x.size)
    out_itemsize = jnp.dtype(out_dtype).itemsize

    G = _choose_fold(n_states)
    S = n_states
    lane_out = G * S
    K_pad = _round_up(n_obs + 1, _SUB)          # +1 sentinel row, sublane-aligned

    # --- tile sizing: budget the real, lane-padded VMEM footprints ----------
    R_total = max(1, _cdiv(N, G))
    out_row = _round_up(lane_out, _LANE) * out_itemsize      # output tile row
    key_row = _LANE * 4                                      # (R, G) pads to 128 lanes
    tmp_row = _round_up(K_pad, _LANE) * (4 + 2)              # iota i32 + one-hot bf16
    rows_out = (2 << 20) // out_row              # ~2 MiB output tile target
    rows_tmp = (4 << 20) // tmp_row              # <=4 MiB one-hot / iota temporaries
    R_cap = max(_SUB, (min(rows_out, rows_tmp) // _SUB) * _SUB)
    # target >= 8 grid steps (>= 4 per TensorCore on v7x megacore) before the cap
    R_tile = min(R_cap, max(_SUB, _round_up(_cdiv(R_total, 8), _SUB)))
    num_steps = _cdiv(R_total, R_tile)
    R_pad = num_steps * R_tile
    N_pad = R_pad * G

    table_plane = _round_up(K_pad, 16) * _round_up(S, _LANE) * 2   # bf16, padded
    budget = (2 * R_tile * (out_row + key_row)      # double-buffered out + key tiles
              + 2 * 2 * table_plane                 # 2 planes x 2 pipeline buffers
              + R_tile * tmp_row                    # live in-kernel temporaries
              + 2 * R_tile * _round_up(S, _LANE) * 4)   # matmul partial sums (f32)
    vmem_limit = int(min(48 << 20, max(16 << 20, budget + (8 << 20))))

    # --- wrapper-side prep (tiny, runs once in XLA) --------------------------
    logp = jnp.where(probs > 0, jnp.log(probs), jnp.float32(_LOG_ZERO))
    logp = jnp.pad(logp, ((0, K_pad - n_obs), (0, 0)),
                   constant_values=_LOG_ZERO)          # sentinel row + row padding
    t_hi = logp.astype(jnp.bfloat16)
    t_lo = (logp - t_hi.astype(jnp.float32)).astype(jnp.bfloat16)

    x_flat = x.reshape(-1).astype(jnp.int32)
    x_flat = jnp.pad(x_flat, (0, N_pad - N))           # pad with index 0 (sliced off)
    valid = (x_flat >= 0) & (x_flat < n_obs)
    # invalid indices hit the sentinel row (all _LOG_ZERO) -> exact -inf output
    key = jnp.where(valid, x_flat, jnp.int32(n_obs)).reshape(R_pad, G)

    cost = pl.CostEstimate(
        flops=4 * R_pad * G * K_pad * S,               # two bf16 planes per segment
        transcendentals=0,
        bytes_accessed=(R_pad * lane_out * out_itemsize
                        + R_pad * G * 4
                        + 2 * K_pad * S * 2))

    out = pl.pallas_call(
        _gather_log_prob_kernel,
        out_shape=jax.ShapeDtypeStruct((R_pad, lane_out), out_dtype),
        grid_spec=pltpu.PrefetchScalarGridSpec(
            num_scalar_prefetch=0,
            grid=(num_steps,),
            in_specs=[
                pl.BlockSpec((R_tile, G), lambda i: (i, 0)),     # packed keys
                pl.BlockSpec((K_pad, S), lambda i: (0, 0)),      # resident hi plane
                pl.BlockSpec((K_pad, S), lambda i: (0, 0)),      # resident lo plane
            ],
            out_specs=pl.BlockSpec((R_tile, lane_out), lambda i: (i, 0)),
        ),
        compiler_params=pltpu.CompilerParams(
            dimension_semantics=("parallel",),   # shards grid steps across TCs (v7x)
            vmem_limit_bytes=vmem_limit,         # derived from the real buffer sum
        ),
        cost_estimate=cost,
    )(key, t_hi, t_lo)

    # (R_pad, G*n_states) -> (N_pad, n_states) is a contiguous (free) reshape.
    out = out.reshape(R_pad * G, S)[:N]
    return out.reshape(*batch_shape, S)
    # TODO(synk): for tables far larger than VMEM (n_obs * n_states * 4 >> 16 MiB)
    # switch to a manual-DMA / scalar-prefetch row gather plus a grid axis over
    # n_states instead of the one-hot matmul.


if __name__ == "__main__":
    key = jax.random.PRNGKey(0)
    B, T = 2, 8
    n_obs, n_states = 16, 32

    k_probs, k_x = jax.random.split(key)

    # Deterministic synthetic emission table: positive, each column sums to 1.
    raw = jax.random.uniform(k_probs, (n_obs, n_states), dtype=jnp.float32) + 0.1
    probs = raw / jnp.sum(raw, axis=0, keepdims=True)

    # Deterministic observation indices.
    x = jax.random.randint(k_x, (B, T), 0, n_obs, dtype=jnp.int32)

    out = discrete_emission_log_prob(x, probs)
    out = jax.block_until_ready(out)

    # Reference: torch.log(probs[x])
    ref = jnp.log(probs[x])
    assert out.shape == (B, T, n_states)
    assert jnp.allclose(out, ref, atol=1e-5, rtol=1e-5), float(
        jnp.max(jnp.abs(out - ref)))

    print("KERNEL_OK")
</pallas_src>

<mosaic_0001>
module attributes {stable_mosaic.version = 11 : i64} {
  func.func @_gather_log_prob_kernel(%arg0: i32, %arg1: memref<8x4xi32, #tpu.memory_space<vmem>>, %arg2: memref<24x32xbf16, #tpu.memory_space<vmem>>, %arg3: memref<24x32xbf16, #tpu.memory_space<vmem>>, %arg4: memref<8x128xf32, #tpu.memory_space<vmem>>) attributes {dimension_semantics = [#tpu.dimension_semantics<parallel>], iteration_bounds = array<i64: 1>, scalar_prefetch = 0 : i64, scratch_operands = 0 : i64, tpu.core_type = #tpu.core_type<tc>, window_params = [{transform_indices = @transform_0, window_bounds = array<i64: 8, 4>}, {pipeline_mode = #tpu.pipeline_mode<synchronous>, transform_indices = @transform_1, window_bounds = array<i64: 24, 32>}, {pipeline_mode = #tpu.pipeline_mode<synchronous>, transform_indices = @transform_2, window_bounds = array<i64: 24, 32>}, {transform_indices = @transform_3, window_bounds = array<i64: 8, 128>}]} {
    %0 = tpu.iota {dimensions = array<i32: 1>} : vector<8x24xi32>
    %c0 = arith.constant 0 : index
    %c0_0 = arith.constant 0 : index
    %1 = vector.load %arg2[%c0, %c0_0] : memref<24x32xbf16, #tpu.memory_space<vmem>>, vector<24x32xbf16>
    %c0_1 = arith.constant 0 : index
    %c0_2 = arith.constant 0 : index
    %2 = vector.load %arg3[%c0_1, %c0_2] : memref<24x32xbf16, #tpu.memory_space<vmem>>, vector<24x32xbf16>
    %c0_3 = arith.constant 0 : index
    %c0_4 = arith.constant 0 : index
    %3 = vector.load %arg1[%c0_3, %c0_4] : memref<8x4xi32, #tpu.memory_space<vmem>>, vector<8x1xi32>
    %4 = vector.broadcast %3 : vector<8x1xi32> to vector<8x24xi32>
    %5 = arith.cmpi eq, %0, %4 : vector<8x24xi32>
    %6 = arith.extui %5 : vector<8x24xi1> to vector<8x24xi32>
    %7 = arith.sitofp %6 : vector<8x24xi32> to vector<8x24xf32>
    %8 = arith.truncf %7 : vector<8x24xf32> to vector<8x24xbf16>
    %cst = arith.constant dense<0.000000e+00> : vector<8x32xf32>
    %9 = tpu.matmul %8, %1, %cst {dimension_numbers = #tpu.dot_dimension_numbers<[1], [0], [0], [1], [0, 0, 1, 1], [], []>} : vector<8x24xbf16>, vector<24x32xbf16>, vector<8x32xf32> -> vector<8x32xf32>
    %cst_5 = arith.constant dense<0.000000e+00> : vector<8x32xf32>
    %10 = tpu.matmul %8, %2, %cst_5 {dimension_numbers = #tpu.dot_dimension_numbers<[1], [0], [0], [1], [0, 0, 1, 1], [], []>} : vector<8x24xbf16>, vector<24x32xbf16>, vector<8x32xf32> -> vector<8x32xf32>
    %11 = arith.addf %9, %10 : vector<8x32xf32>
    %cst_6 = arith.constant -5.000000e+29 : f32
    %12 = vector.broadcast %cst_6 : f32 to vector<8x32xf32>
    %13 = arith.cmpf ole, %11, %12 : vector<8x32xf32>
    %cst_7 = arith.constant 0xFF800000 : f32
    %14 = vector.broadcast %cst_7 : f32 to vector<8x32xf32>
    %15 = arith.select %13, %14, %11 : vector<8x32xi1>, vector<8x32xf32>
    %c0_8 = arith.constant 0 : index
    %c0_9 = arith.constant 0 : index
    %16 = vector.load %arg4[%c0_8, %c0_9] : memref<8x128xf32, #tpu.memory_space<vmem>>, vector<8x32xf32>
    tpu.vector_store %arg4[%c0_8, %c0_9], %15 {strides = array<i32>} : memref<8x128xf32, #tpu.memory_space<vmem>>, vector<8x32xf32>,
    %c0_10 = arith.constant 0 : index
    %c1 = arith.constant 1 : index
    %17 = vector.load %arg1[%c0_10, %c1] : memref<8x4xi32, #tpu.memory_space<vmem>>, vector<8x1xi32>
    %18 = vector.broadcast %17 : vector<8x1xi32> to vector<8x24xi32>
    %19 = arith.cmpi eq, %0, %18 : vector<8x24xi32>
    %20 = arith.extui %19 : vector<8x24xi1> to vector<8x24xi32>
    %21 = arith.sitofp %20 : vector<8x24xi32> to vector<8x24xf32>
    %22 = arith.truncf %21 : vector<8x24xf32> to vector<8x24xbf16>
    %cst_11 = arith.constant dense<0.000000e+00> : vector<8x32xf32>
    %23 = tpu.matmul %22, %1, %cst_11 {dimension_numbers = #tpu.dot_dimension_numbers<[1], [0], [0], [1], [0, 0, 1, 1], [], []>} : vector<8x24xbf16>, vector<24x32xbf16>, vector<8x32xf32> -> vector<8x32xf32>
    %cst_12 = arith.constant dense<0.000000e+00> : vector<8x32xf32>
    %24 = tpu.matmul %22, %2, %cst_12 {dimension_numbers = #tpu.dot_dimension_numbers<[1], [0], [0], [1], [0, 0, 1, 1], [], []>} : vector<8x24xbf16>, vector<24x32xbf16>, vector<8x32xf32> -> vector<8x32xf32>
    %25 = arith.addf %23, %24 : vector<8x32xf32>
    %cst_13 = arith.constant -5.000000e+29 : f32
    %26 = vector.broadcast %cst_13 : f32 to vector<8x32xf32>
    %27 = arith.cmpf ole, %25, %26 : vector<8x32xf32>
    %cst_14 = arith.constant 0xFF800000 : f32
    %28 = vector.broadcast %cst_14 : f32 to vector<8x32xf32>
    %29 = arith.select %27, %28, %25 : vector<8x32xi1>, vector<8x32xf32>
    %c0_15 = arith.constant 0 : index
    %c32 = arith.constant 32 : index
    %30 = vector.load %arg4[%c0_15, %c32] : memref<8x128xf32, #tpu.memory_space<vmem>>, vector<8x32xf32>
    tpu.vector_store %arg4[%c0_15, %c32], %29 {strides = array<i32>} : memref<8x128xf32, #tpu.memory_space<vmem>>, vector<8x32xf32>,
    %c0_16 = arith.constant 0 : index
    %c2 = arith.constant 2 : index
    %31 = vector.load %arg1[%c0_16, %c2] : memref<8x4xi32, #tpu.memory_space<vmem>>, vector<8x1xi32>
    %32 = vector.broadcast %31 : vector<8x1xi32> to vector<8x24xi32>
    %33 = arith.cmpi eq, %0, %32 : vector<8x24xi32>
    %34 = arith.extui %33 : vector<8x24xi1> to vector<8x24xi32>
    %35 = arith.sitofp %34 : vector<8x24xi32> to vector<8x24xf32>
    %36 = arith.truncf %35 : vector<8x24xf32> to vector<8x24xbf16>
    %cst_17 = arith.constant dense<0.000000e+00> : vector<8x32xf32>
    %37 = tpu.matmul %36, %1, %cst_17 {dimension_numbers = #tpu.dot_dimension_numbers<[1], [0], [0], [1], [0, 0, 1, 1], [], []>} : vector<8x24xbf16>, vector<24x32xbf16>, vector<8x32xf32> -> vector<8x32xf32>
    %cst_18 = arith.constant dense<0.000000e+00> : vector<8x32xf32>
    %38 = tpu.matmul %36, %2, %cst_18 {dimension_numbers = #tpu.dot_dimension_numbers<[1], [0], [0], [1], [0, 0, 1, 1], [], []>} : vector<8x24xbf16>, vector<24x32xbf16>, vector<8x32xf32> -> vector<8x32xf32>
    %39 = arith.addf %37, %38 : vector<8x32xf32>
    %cst_19 = arith.constant -5.000000e+29 : f32
    %40 = vector.broadcast %cst_19 : f32 to vector<8x32xf32>
    %41 = arith.cmpf ole, %39, %40 : vector<8x32xf32>
    %cst_20 = arith.constant 0xFF800000 : f32
    %42 = vector.broadcast %cst_20 : f32 to vector<8x32xf32>
    %43 = arith.select %41, %42, %39 : vector<8x32xi1>, vector<8x32xf32>
    %c0_21 = arith.constant 0 : index
    %c64 = arith.constant 64 : index
    %44 = vector.load %arg4[%c0_21, %c64] : memref<8x128xf32, #tpu.memory_space<vmem>>, vector<8x32xf32>
    tpu.vector_store %arg4[%c0_21, %c64], %43 {strides = array<i32>} : memref<8x128xf32, #tpu.memory_space<vmem>>, vector<8x32xf32>,
    %c0_22 = arith.constant 0 : index
    %c3 = arith.constant 3 : index
    %45 = vector.load %arg1[%c0_22, %c3] : memref<8x4xi32, #tpu.memory_space<vmem>>, vector<8x1xi32>
    %46 = vector.broadcast %45 : vector<8x1xi32> to vector<8x24xi32>
    %47 = arith.cmpi eq, %0, %46 : vector<8x24xi32>
    %48 = arith.extui %47 : vector<8x24xi1> to vector<8x24xi32>
    %49 = arith.sitofp %48 : vector<8x24xi32> to vector<8x24xf32>
    %50 = arith.truncf %49 : vector<8x24xf32> to vector<8x24xbf16>
    %cst_23 = arith.constant dense<0.000000e+00> : vector<8x32xf32>
    %51 = tpu.matmul %50, %1, %cst_23 {dimension_numbers = #tpu.dot_dimension_numbers<[1], [0], [0], [1], [0, 0, 1, 1], [], []>} : vector<8x24xbf16>, vector<24x32xbf16>, vector<8x32xf32> -> vector<8x32xf32>
    %cst_24 = arith.constant dense<0.000000e+00> : vector<8x32xf32>
    %52 = tpu.matmul %50, %2, %cst_24 {dimension_numbers = #tpu.dot_dimension_numbers<[1], [0], [0], [1], [0, 0, 1, 1], [], []>} : vector<8x24xbf16>, vector<24x32xbf16>, vector<8x32xf32> -> vector<8x32xf32>
    %53 = arith.addf %51, %52 : vector<8x32xf32>
    %cst_25 = arith.constant -5.000000e+29 : f32
    %54 = vector.broadcast %cst_25 : f32 to vector<8x32xf32>
    %55 = arith.cmpf ole, %53, %54 : vector<8x32xf32>
    %cst_26 = arith.constant 0xFF800000 : f32
    %56 = vector.broadcast %cst_26 : f32 to vector<8x32xf32>
    %57 = arith.select %55, %56, %53 : vector<8x32xi1>, vector<8x32xf32>
    %c0_27 = arith.constant 0 : index
    %c96 = arith.constant 96 : index
    %58 = vector.load %arg4[%c0_27, %c96] : memref<8x128xf32, #tpu.memory_space<vmem>>, vector<8x32xf32>
    tpu.vector_store %arg4[%c0_27, %c96], %57 {strides = array<i32>} : memref<8x128xf32, #tpu.memory_space<vmem>>, vector<8x32xf32>,
    return
  }
  func.func @transform_0(%arg0: i32) -> (i32, i32) {
    %c0_i32 = arith.constant 0 : i32
    %c0_i32_0 = arith.constant 0 : i32
    return %arg0, %c0_i32 : i32, i32
  }
  func.func @transform_1(%arg0: i32) -> (i32, i32) {
    %c0_i32 = arith.constant 0 : i32
    %c0_i32_0 = arith.constant 0 : i32
    %c0_i32_1 = arith.constant 0 : i32
    return %c0_i32, %c0_i32_0 : i32, i32
  }
  func.func @transform_2(%arg0: i32) -> (i32, i32) {
    %c0_i32 = arith.constant 0 : i32
    %c0_i32_0 = arith.constant 0 : i32
    %c0_i32_1 = arith.constant 0 : i32
    return %c0_i32, %c0_i32_0 : i32, i32
  }
  func.func @transform_3(%arg0: i32) -> (i32, i32) {
    %c0_i32 = arith.constant 0 : i32
    %c0_i32_0 = arith.constant 0 : i32
    return %arg0, %c0_i32 : i32, i32
  }
}

</mosaic_0001>

<llo_original>
// kernel: tpu_custom_call.1
$region0: #{tpu_custom_call.1}
  #allocation0 [shape = 'u32[]', space=smem, size = 0x4, offset = 0x4, fixed_abs, tag = 'smem constant byte address 0x4 - core index']
  #allocation1 [shape = 'u32[144,128]{1,0:T(1,128)}', space=vmem, size = 0x12000, scoped, tag = 'internal scratch']
  %s0 = inlined_call_operand.vmem [shape: s32[8,4], index: 0, kind: input, shape index: {}]
  %s1 = inlined_call_operand.vmem [shape: bf16[24,32], index: 1, kind: input, shape index: {}]
  %s2 = inlined_call_operand.hbm [shape: bf16[24,32], index: 2, kind: input, shape index: {}]
  %s3 = inlined_call_operand.hbm [shape: f32[8,128], index: 3, kind: output, shape index: {}]
  %s4 = sld [smem:[#allocation0]]
  $region26: #{tpu_custom_call.1} parent=0
    _
  %s6 = ssub.s32 1, %s4
  %s7 = scalar_select 0, %s6, %s4
  $region1: #{tpu_custom_call.1} parent=0
    #allocation2 [shape = 'u8[6144]{0}', space=vmem, size = 0x1800, scoped, tag = 'input window, operand 2, single buffered']
    #allocation3 [shape = 's32[1]{0}', space=sflag, size = 0x4, scoped, tag = 'scoped memory for tpu_custom_call.1']
    #allocation4 [shape = 's32[1]{0}', space=sflag, size = 0x4, scoped, tag = 'scoped memory for tpu_custom_call.1']
    #allocation5 [shape = 'u8[4096]{0}', space=vmem, size = 0x1000, scoped, tag = 'output window, operand 0, single buffered']
    %8 = vsyncpa [#allocation3], 0
    %9 = vsyncpa [#allocation4], 0
    // Predicated region
    $region2: #{tpu_custom_call.1} parent=1 // pred_check
      _
    $region3: #{tpu_custom_call.1} parent=1 // pred_check_branch
      %11 = sbr.rel (0) target = $region5
    $region4: #{tpu_custom_call.1} parent=1 // pred_region
      _
    $region5: #{tpu_custom_call.1} parent=1 // pred_fallthru
      _
    // Predicated region
    $region6: #{tpu_custom_call.1} parent=1 // pred_check
      _
    $region7: #{tpu_custom_call.1} parent=1 // pred_check_branch
      %13 = sbr.rel (0) target = $region9
    $region8: #{tpu_custom_call.1} parent=1 // pred_region
      _
    $region9: #{tpu_custom_call.1} parent=1 // pred_fallthru
      _
    // Predicated region
    $region10: #{tpu_custom_call.1} parent=1 // pred_check
      _
    $region11: #{tpu_custom_call.1} parent=1 // pred_check_branch
      %15 = sbr.rel (0) target = $region13
    $region12: #{tpu_custom_call.1} parent=1 // pred_region
      %s17 = ssub.s32 192, 192
      %18 = vsyncadd [#allocation3], %s17
      %s19 = sshll.u32 [#allocation2], 4
      %s20 = int_to_ptr.vmem [resolvable:$true] %s19
      %25 = dma.hbm_to_vmem [thread:$0]  %s2, 192, %s20, [#allocation3], 64, 64, 4
    $region13: #{tpu_custom_call.1} parent=1 // pred_fallthru
      _
    // Predicated region
    $region14: #{tpu_custom_call.1} parent=1 // pred_check
      _
    $region15: #{tpu_custom_call.1} parent=1 // pred_check_branch
      %27 = sbr.rel (0) target = $region17
    $region16: #{tpu_custom_call.1} parent=1 // pred_region
      %28 = dma.done [#allocation3], 192
    $region17: #{tpu_custom_call.1} parent=1 // pred_fallthru
      _
    %v30 = vlaneseq
    %v31 = vand.u32 %v30, 127
    %v32 = vld [vmem:[%s1] sm:$0xf]
    %v33 = vld [vmem:[%s1 + $0x4] sm:$0xf]
    %v34 = vld [vmem:[%s1 + $0x8] sm:$0xf]
    %v35 = vld [vmem:[#allocation2] sm:$0xf]
    %v36 = vld [vmem:[#allocation2 + $0x4] sm:$0xf]
    %v37 = vld [vmem:[#allocation2 + $0x8] sm:$0xf]
    %v38 = vld [vmem:[%s0] sm:$0xff]
    %39 = vset.pattern.permute.xlu0 0
    %40 = vperm.xlu0 %39, %v38
    %v41 = vpop.permute.xlu0 %40
    %vm42 = vcmp.eq.s32.totalorder %v31, %v41
    %v43 = vsel %vm42, 1, 0
    %v44 = vcvt.s32.f32 %v43
    %v45 = vpack.c.bf16 %v44, %v44
    %v49 = vunpack.c.l.b16 %v35
    %v50 = vunpack.c.l.b16 %v36
    %v51 = vunpack.c.l.b16 %v37
    %v52 = vpack.c.b16 %v50, %v49
    %v53 = vpack.c.b16 %v51, %v51
    %vm55 = vcmask 195584
    %v57 = vsel %vm55, %v45, 0
    %vm59 = vcmask 1043456
    %v61 = vsel %vm59, %v53, 0
    %63 = vmatprep.subr.bf16.mxu0 0
    %64 = vmatpush1.bf16.msra.mxu0 %v52
    %65 = vmatprep.subr.bf16.mxu0 0
    %66 = vmatpush1.bf16.msra.mxu0 %v61
    %67 = vmatprep.subr.bf16.mxu0 0
    %68 = vmatpush1.bf16.msra.mxu0 0
    %69 = vmatprep.subr.bf16.mxu0 0
    %70 = vmatpush1.bf16.msra.mxu0 0
    %71 = vmatprep.subr.bf16.mxu0 0
    %72 = vmatpush1.bf16.msra.mxu0 0
    %73 = vmatprep.subr.bf16.mxu0 0
    %74 = vmatpush1.bf16.msra.mxu0 0
    %75 = vmatprep.subr.bf16.mxu0 0
    %76 = vmatpush1.bf16.msra.mxu0 0
    %77 = vmatprep.subr.bf16.mxu0 0
    %78 = vmatpush1.bf16.msra.mxu0 0
    %79 = vmatprep.subr.bf16.mxu0 0
    %80 = vmatpush1.bf16.msra.mxu0 0
    %81 = vmatprep.subr.bf16.mxu0 0
    %82 = vmatpush1.bf16.msra.mxu0 0
    %83 = vmatprep.subr.bf16.mxu0 0
    %84 = vmatpush1.bf16.msra.mxu0 0
    %85 = vmatprep.subr.bf16.mxu0 0
    %86 = vmatpush1.bf16.msra.mxu0 0
    %87 = vmatprep.subr.bf16.mxu0 0
    %88 = vmatpush1.bf16.msra.mxu0 0
    %89 = vmatprep.subr.bf16.mxu0 0
    %90 = vmatpush1.bf16.msra.mxu0 0
    %91 = vmatprep.subr.bf16.mxu0 0
    %92 = vmatpush1.bf16.msra.mxu0 0
    %93 = vmatprep.subr.bf16.mxu0 0
    %94 = vmatpush1.bf16.msra.mxu0 0
    %95 = vmatprep.mubr.bf16.mxu0 0
    %96 = vmatmul.mubr.bf16.gmra.mrb[0].mxu0 %v57
    %v97 = vpop.f32.mrb[0].mxu0
    %v98 = vadd.f32 0.0, %v97
    %v99 = vpop.f32.mrb[0].mxu0
    %v100 = vpop.f32.mrb[0].mxu0
    %v101 = vpop.f32.mrb[0].mxu0
    %102 = vdwg.mxu0
    %v106 = vunpack.c.l.b16 %v32
    %v107 = vunpack.c.l.b16 %v33
    %v108 = vunpack.c.l.b16 %v34
    %v109 = vpack.c.b16 %v107, %v106
    %v110 = vpack.c.b16 %v108, %v108
    %v113 = vsel %vm59, %v110, 0
    %115 = vmatprep.subr.bf16.mxu0 0
    %116 = vmatpush1.bf16.msra.mxu0 %v109
    %117 = vmatprep.subr.bf16.mxu0 0
    %118 = vmatpush1.bf16.msra.mxu0 %v113
    %119 = vmatprep.subr.bf16.mxu0 0
    %120 = vmatpush1.bf16.msra.mxu0 0
    %121 = vmatprep.subr.bf16.mxu0 0
    %122 = vmatpush1.bf16.msra.mxu0 0
    %123 = vmatprep.subr.bf16.mxu0 0
    %124 = vmatpush1.bf16.msra.mxu0 0
    %125 = vmatprep.subr.bf16.mxu0 0
    %126 = vmatpush1.bf16.msra.mxu0 0
    %127 = vmatprep.subr.bf16.mxu0 0
    %128 = vmatpush1.bf16.msra.mxu0 0
    %129 = vmatprep.subr.bf16.mxu0 0
    %130 = vmatpush1.bf16.msra.mxu0 0
    %131 = vmatprep.subr.bf16.mxu0 0
    %132 = vmatpush1.bf16.msra.mxu0 0
    %133 = vmatprep.subr.bf16.mxu0 0
    %134 = vmatpush1.bf16.msra.mxu0 0
    %135 = vmatprep.subr.bf16.mxu0 0
    %136 = vmatpush1.bf16.msra.mxu0 0
    %137 = vmatprep.subr.bf16.mxu0 0
    %138 = vmatpush1.bf16.msra.mxu0 0
    %139 = vmatprep.subr.bf16.mxu0 0
    %140 = vmatpush1.bf16.msra.mxu0 0
    %141 = vmatprep.subr.bf16.mxu0 0
    %142 = vmatpush1.bf16.msra.mxu0 0
    %143 = vmatprep.subr.bf16.mxu0 0
    %144 = vmatpush1.bf16.msra.mxu0 0
    %145 = vmatprep.subr.bf16.mxu0 0
    %146 = vmatpush1.bf16.msra.mxu0 0
    %147 = vmatprep.mubr.bf16.mxu0 0
    %148 = vmatmul.mubr.bf16.gmra.mrb[0].mxu0 %v57
    %v149 = vpop.f32.mrb[0].mxu0
    %v150 = vadd.f32 %v98, %v149
    %v151 = vpop.f32.mrb[0].mxu0
    %v152 = vpop.f32.mrb[0].mxu0
    %v153 = vpop.f32.mrb[0].mxu0
    %154 = vdwg.mxu0
    %vm155 = vcmp.le.f32.partialorder %v150, -5e+29
    %v156 = vsel %vm155, -inf, %v150
    %vm157 = vcmask 261120
    %158 = vst.msk [vmem:[#allocation5] sm:$0xff] %vm157, %v156
    %v159 = vld [vmem:[%s0] sm:$0xff]
    %160 = vset.pattern.permute.xlu0 1
    %161 = vperm.xlu0 %160, %v159
    %v162 = vpop.permute.xlu0 %161
    %vm163 = vcmp.eq.s32.totalorder %v31, %v162
    %v164 = vsel %vm163, 1, 0
    %v165 = vcvt.s32.f32 %v164
    %v166 = vpack.c.bf16 %v165, %v165
    %v168 = vsel %vm55, %v166, 0
    %170 = vmatprep.subr.bf16.mxu0 0
    %171 = vmatpush1.bf16.msra.mxu0 %v52
    %172 = vmatprep.subr.bf16.mxu0 0
    %173 = vmatpush1.bf16.msra.mxu0 %v61
    %174 = vmatprep.subr.bf16.mxu0 0
    %175 = vmatpush1.bf16.msra.mxu0 0
    %176 = vmatprep.subr.bf16.mxu0 0
    %177 = vmatpush1.bf16.msra.mxu0 0
    %178 = vmatprep.subr.bf16.mxu0 0
    %179 = vmatpush1.bf16.msra.mxu0 0
    %180 = vmatprep.subr.bf16.mxu0 0
    %181 = vmatpush1.bf16.msra.mxu0 0
    %182 = vmatprep.subr.bf16.mxu0 0
    %183 = vmatpush1.bf16.msra.mxu0 0
    %184 = vmatprep.subr.bf16.mxu0 0
    %185 = vmatpush1.bf16.msra.mxu0 0
    %186 = vmatprep.subr.bf16.mxu0 0
    %187 = vmatpush1.bf16.msra.mxu0 0
    %188 = vmatprep.subr.bf16.mxu0 0
    %189 = vmatpush1.bf16.msra.mxu0 0
    %190 = vmatprep.subr.bf16.mxu0 0
    %191 = vmatpush1.bf16.msra.mxu0 0
    %192 = vmatprep.subr.bf16.mxu0 0
    %193 = vmatpush1.bf16.msra.mxu0 0
    %194 = vmatprep.subr.bf16.mxu0 0
    %195 = vmatpush1.bf16.msra.mxu0 0
    %196 = vmatprep.subr.bf16.mxu0 0
    %197 = vmatpush1.bf16.msra.mxu0 0
    %198 = vmatprep.subr.bf16.mxu0 0
    %199 = vmatpush1.bf16.msra.mxu0 0
    %200 = vmatprep.subr.bf16.mxu0 0
    %201 = vmatpush1.bf16.msra.mxu0 0
    %202 = vmatprep.mubr.bf16.mxu0 0
    %203 = vmatmul.mubr.bf16.gmra.mrb[0].mxu0 %v168
    %v204 = vpop.f32.mrb[0].mxu0
    %v205 = vadd.f32 0.0, %v204
    %v206 = vpop.f32.mrb[0].mxu0
    %v207 = vpop.f32.mrb[0].mxu0
    %v208 = vpop.f32.mrb[0].mxu0
    %209 = vdwg.mxu0
    %210 = vmatprep.subr.bf16.mxu0 0
    %211 = vmatpush1.bf16.msra.mxu0 %v109
    %212 = vmatprep.subr.bf16.mxu0 0
    %213 = vmatpush1.bf16.msra.mxu0 %v113
    %214 = vmatprep.subr.bf16.mxu0 0
    %215 = vmatpush1.bf16.msra.mxu0 0
    %216 = vmatprep.subr.bf16.mxu0 0
    %217 = vmatpush1.bf16.msra.mxu0 0
    %218 = vmatprep.subr.bf16.mxu0 0
    %219 = vmatpush1.bf16.msra.mxu0 0
    %220 = vmatprep.subr.bf16.mxu0 0
    %221 = vmatpush1.bf16.msra.mxu0 0
    %222 = vmatprep.subr.bf16.mxu0 0
    %223 = vmatpush1.bf16.msra.mxu0 0
    %224 = vmatprep.subr.bf16.mxu0 0
    %225 = vmatpush1.bf16.msra.mxu0 0
    %226 = vmatprep.subr.bf16.mxu0 0
    %227 = vmatpush1.bf16.msra.mxu0 0
    %228 = vmatprep.subr.bf16.mxu0 0
    %229 = vmatpush1.bf16.msra.mxu0 0
    %230 = vmatprep.subr.bf16.mxu0 0
    %231 = vmatpush1.bf16.msra.mxu0 0
    %232 = vmatprep.subr.bf16.mxu0 0
    %233 = vmatpush1.bf16.msra.mxu0 0
    %234 = vmatprep.subr.bf16.mxu0 0
    %235 = vmatpush1.bf16.msra.mxu0 0
    %236 = vmatprep.subr.bf16.mxu0 0
    %237 = vmatpush1.bf16.msra.mxu0 0
    %238 = vmatprep.subr.bf16.mxu0 0
    %239 = vmatpush1.bf16.msra.mxu0 0
    %240 = vmatprep.subr.bf16.mxu0 0
    %241 = vmatpush1.bf16.msra.mxu0 0
    %242 = vmatprep.mubr.bf16.mxu0 0
    %243 = vmatmul.mubr.bf16.gmra.mrb[0].mxu0 %v168
    %v244 = vpop.f32.mrb[0].mxu0
    %v245 = vadd.f32 %v205, %v244
    %v246 = vpop.f32.mrb[0].mxu0
    %v247 = vpop.f32.mrb[0].mxu0
    %v248 = vpop.f32.mrb[0].mxu0
    %249 = vdwg.mxu0
    %vm250 = vcmp.le.f32.partialorder %v245, -5e+29
    %v251 = vsel %vm250, -inf, %v245
    %253 = vrot.lane.b32.xlu0 %v251, 32
    %v254 = vpop.permute.xlu0 %253
    %vm256 = vcmask 523520
    %257 = vst.msk [vmem:[#allocation5] sm:$0xff] %vm256, %v254
    %v258 = vld [vmem:[%s0] sm:$0xff]
    %259 = vset.pattern.permute.xlu0 2
    %260 = vperm.xlu0 %259, %v258
    %v261 = vpop.permute.xlu0 %260
    %vm262 = vcmp.eq.s32.totalorder %v31, %v261
    %v263 = vsel %vm262, 1, 0
    %v264 = vcvt.s32.f32 %v263
    %v265 = vpack.c.bf16 %v264, %v264
    %v267 = vsel %vm55, %v265, 0
    %269 = vmatprep.subr.bf16.mxu0 0
    %270 = vmatpush1.bf16.msra.mxu0 %v52
    %271 = vmatprep.subr.bf16.mxu0 0
    %272 = vmatpush1.bf16.msra.mxu0 %v61
    %273 = vmatprep.subr.bf16.mxu0 0
    %274 = vmatpush1.bf16.msra.mxu0 0
    %275 = vmatprep.subr.bf16.mxu0 0
    %276 = vmatpush1.bf16.msra.mxu0 0
    %277 = vmatprep.subr.bf16.mxu0 0
    %278 = vmatpush1.bf16.msra.mxu0 0
    %279 = vmatprep.subr.bf16.mxu0 0
    %280 = vmatpush1.bf16.msra.mxu0 0
    %281 = vmatprep.subr.bf16.mxu0 0
    %282 = vmatpush1.bf16.msra.mxu0 0
    %283 = vmatprep.subr.bf16.mxu0 0
    %284 = vmatpush1.bf16.msra.mxu0 0
    %285 = vmatprep.subr.bf16.mxu0 0
    %286 = vmatpush1.bf16.msra.mxu0 0
    %287 = vmatprep.subr.bf16.mxu0 0
    %288 = vmatpush1.bf16.msra.mxu0 0
    %289 = vmatprep.subr.bf16.mxu0 0
    %290 = vmatpush1.bf16.msra.mxu0 0
    %291 = vmatprep.subr.bf16.mxu0 0
    %292 = vmatpush1.bf16.msra.mxu0 0
    %293 = vmatprep.subr.bf16.mxu0 0
    %294 = vmatpush1.bf16.msra.mxu0 0
    %295 = vmatprep.subr.bf16.mxu0 0
    %296 = vmatpush1.bf16.msra.mxu0 0
    %297 = vmatprep.subr.bf16.mxu0 0
    %298 = vmatpush1.bf16.msra.mxu0 0
    %299 = vmatprep.subr.bf16.mxu0 0
    %300 = vmatpush1.bf16.msra.mxu0 0
    %301 = vmatprep.mubr.bf16.mxu0 0
    %302 = vmatmul.mubr.bf16.gmra.mrb[0].mxu0 %v267
    %v303 = vpop.f32.mrb[0].mxu0
    %v304 = vadd.f32 0.0, %v303
    %v305 = vpop.f32.mrb[0].mxu0
    %v306 = vpop.f32.mrb[0].mxu0
    %v307 = vpop.f32.mrb[0].mxu0
    %308 = vdwg.mxu0
    %309 = vmatprep.subr.bf16.mxu0 0
    %310 = vmatpush1.bf16.msra.mxu0 %v109
    %311 = vmatprep.subr.bf16.mxu0 0
    %312 = vmatpush1.bf16.msra.mxu0 %v113
    %313 = vmatprep.subr.bf16.mxu0 0
    %314 = vmatpush1.bf16.msra.mxu0 0
    %315 = vmatprep.subr.bf16.mxu0 0
    %316 = vmatpush1.bf16.msra.mxu0 0
    %317 = vmatprep.subr.bf16.mxu0 0
    %318 = vmatpush1.bf16.msra.mxu0 0
    %319 = vmatprep.subr.bf16.mxu0 0
    %320 = vmatpush1.bf16.msra.mxu0 0
    %321 = vmatprep.subr.bf16.mxu0 0
    %322 = vmatpush1.bf16.msra.mxu0 0
    %323 = vmatprep.subr.bf16.mxu0 0
    %324 = vmatpush1.bf16.msra.mxu0 0
    %325 = vmatprep.subr.bf16.mxu0 0
    %326 = vmatpush1.bf16.msra.mxu0 0
    %327 = vmatprep.subr.bf16.mxu0 0
    %328 = vmatpush1.bf16.msra.mxu0 0
    %329 = vmatprep.subr.bf16.mxu0 0
    %330 = vmatpush1.bf16.msra.mxu0 0
    %331 = vmatprep.subr.bf16.mxu0 0
    %332 = vmatpush1.bf16.msra.mxu0 0
    %333 = vmatprep.subr.bf16.mxu0 0
    %334 = vmatpush1.bf16.msra.mxu0 0
    %335 = vmatprep.subr.bf16.mxu0 0
    %336 = vmatpush1.bf16.msra.mxu0 0
    %337 = vmatprep.subr.bf16.mxu0 0
    %338 = vmatpush1.bf16.msra.mxu0 0
    %339 = vmatprep.subr.bf16.mxu0 0
    %340 = vmatpush1.bf16.msra.mxu0 0
    %341 = vmatprep.mubr.bf16.mxu0 0
    %342 = vmatmul.mubr.bf16.gmra.mrb[0].mxu0 %v267
    %v343 = vpop.f32.mrb[0].mxu0
    %v344 = vadd.f32 %v304, %v343
    %v345 = vpop.f32.mrb[0].mxu0
    %v346 = vpop.f32.mrb[0].mxu0
    %v347 = vpop.f32.mrb[0].mxu0
    %348 = vdwg.mxu0
    %vm349 = vcmp.le.f32.partialorder %v344, -5e+29
    %v350 = vsel %vm349, -inf, %v344
    %352 = vrot.lane.b32.xlu0 %v350, 64
    %v353 = vpop.permute.xlu0 %352
    %vm355 = vcmask 785920
    %356 = vst.msk [vmem:[#allocation5] sm:$0xff] %vm355, %v353
    %v357 = vld [vmem:[%s0] sm:$0xff]
    %358 = vset.pattern.permute.xlu0 3
    %359 = vperm.xlu0 %358, %v357
    %v360 = vpop.permute.xlu0 %359
    %vm361 = vcmp.eq.s32.totalorder %v31, %v360
    %v362 = vsel %vm361, 1, 0
    %v363 = vcvt.s32.f32 %v362
    %v364 = vpack.c.bf16 %v363, %v363
    %v366 = vsel %vm55, %v364, 0
    %368 = vmatprep.subr.bf16.mxu0 0
    %369 = vmatpush1.bf16.msra.mxu0 %v52
    %370 = vmatprep.subr.bf16.mxu0 0
    %371 = vmatpush1.bf16.msra.mxu0 %v61
    %372 = vmatprep.subr.bf16.mxu0 0
    %373 = vmatpush1.bf16.msra.mxu0 0
    %374 = vmatprep.subr.bf16.mxu0 0
    %375 = vmatpush1.bf16.msra.mxu0 0
    %376 = vmatprep.subr.bf16.mxu0 0
    %377 = vmatpush1.bf16.msra.mxu0 0
    %378 = vmatprep.subr.bf16.mxu0 0
    %379 = vmatpush1.bf16.msra.mxu0 0
    %380 = vmatprep.subr.bf16.mxu0 0
    %381 = vmatpush1.bf16.msra.mxu0 0
    %382 = vmatprep.subr.bf16.mxu0 0
    %383 = vmatpush1.bf16.msra.mxu0 0
    %384 = vmatprep.subr.bf16.mxu0 0
    %385 = vmatpush1.bf16.msra.mxu0 0
    %386 = vmatprep.subr.bf16.mxu0 0
    %387 = vmatpush1.bf16.msra.mxu0 0
    %388 = vmatprep.subr.bf16.mxu0 0
    %389 = vmatpush1.bf16.msra.mxu0 0
    %390 = vmatprep.subr.bf16.mxu0 0
    %391 = vmatpush1.bf16.msra.mxu0 0
    %392 = vmatprep.subr.bf16.mxu0 0
    %393 = vmatpush1.bf16.msra.mxu0 0
    %394 = vmatprep.subr.bf16.mxu0 0
    %395 = vmatpush1.bf16.msra.mxu0 0
    %396 = vmatprep.subr.bf16.mxu0 0
    %397 = vmatpush1.bf16.msra.mxu0 0
    %398 = vmatprep.subr.bf16.mxu0 0
    %399 = vmatpush1.bf16.msra.mxu0 0
    %400 = vmatprep.mubr.bf16.mxu0 0
    %401 = vmatmul.mubr.bf16.gmra.mrb[0].mxu0 %v366
    %v402 = vpop.f32.mrb[0].mxu0
    %v403 = vadd.f32 0.0, %v402
    %v404 = vpop.f32.mrb[0].mxu0
    %v405 = vpop.f32.mrb[0].mxu0
    %v406 = vpop.f32.mrb[0].mxu0
    %407 = vdwg.mxu0
    %408 = vmatprep.subr.bf16.mxu0 0
    %409 = vmatpush1.bf16.msra.mxu0 %v109
    %410 = vmatprep.subr.bf16.mxu0 0
    %411 = vmatpush1.bf16.msra.mxu0 %v113
    %412 = vmatprep.subr.bf16.mxu0 0
    %413 = vmatpush1.bf16.msra.mxu0 0
    %414 = vmatprep.subr.bf16.mxu0 0
    %415 = vmatpush1.bf16.msra.mxu0 0
    %416 = vmatprep.subr.bf16.mxu0 0
    %417 = vmatpush1.bf16.msra.mxu0 0
    %418 = vmatprep.subr.bf16.mxu0 0
    %419 = vmatpush1.bf16.msra.mxu0 0
    %420 = vmatprep.subr.bf16.mxu0 0
    %421 = vmatpush1.bf16.msra.mxu0 0
    %422 = vmatprep.subr.bf16.mxu0 0
    %423 = vmatpush1.bf16.msra.mxu0 0
    %424 = vmatprep.subr.bf16.mxu0 0
    %425 = vmatpush1.bf16.msra.mxu0 0
    %426 = vmatprep.subr.bf16.mxu0 0
    %427 = vmatpush1.bf16.msra.mxu0 0
    %428 = vmatprep.subr.bf16.mxu0 0
    %429 = vmatpush1.bf16.msra.mxu0 0
    %430 = vmatprep.subr.bf16.mxu0 0
    %431 = vmatpush1.bf16.msra.mxu0 0
    %432 = vmatprep.subr.bf16.mxu0 0
    %433 = vmatpush1.bf16.msra.mxu0 0
    %434 = vmatprep.subr.bf16.mxu0 0
    %435 = vmatpush1.bf16.msra.mxu0 0
    %436 = vmatprep.subr.bf16.mxu0 0
    %437 = vmatpush1.bf16.msra.mxu0 0
    %438 = vmatprep.subr.bf16.mxu0 0
    %439 = vmatpush1.bf16.msra.mxu0 0
    %440 = vmatprep.mubr.bf16.mxu0 0
    %441 = vmatmul.mubr.bf16.gmra.mrb[0].mxu0 %v366
    %v442 = vpop.f32.mrb[0].mxu0
    %v443 = vadd.f32 %v403, %v442
    %v444 = vpop.f32.mrb[0].mxu0
    %v445 = vpop.f32.mrb[0].mxu0
    %v446 = vpop.f32.mrb[0].mxu0
    %447 = vdwg.mxu0
    %vm448 = vcmp.le.f32.partialorder %v443, -5e+29
    %v449 = vsel %vm448, -inf, %v443
    %451 = vrot.lane.b32.xlu0 %v449, 96
    %v452 = vpop.permute.xlu0 %451
    %vm454 = vcmask 1048320
    %455 = vst.msk [vmem:[#allocation5] sm:$0xff] %vm454, %v452
    // Predicated region
    $region18: #{tpu_custom_call.1} parent=1 // pred_check
      _
    $region19: #{tpu_custom_call.1} parent=1 // pred_check_branch
      %457 = sbr.rel (0) target = $region21
    $region20: #{tpu_custom_call.1} parent=1 // pred_region
      %s459 = ssub.s32 128, 128
      %460 = vsyncadd [#allocation4], %s459
      %s462 = sshll.u32 [#allocation5], 4
      %s463 = int_to_ptr.vmem [resolvable:$true] %s462
      %465 = dma.vmem_to_hbm [thread:$0]  %s463, 128, %s3, [#allocation4]
    $region21: #{tpu_custom_call.1} parent=1 // pred_fallthru
      _
    // Predicated region
    $region22: #{tpu_custom_call.1} parent=1 // pred_check
      _
    $region23: #{tpu_custom_call.1} parent=1 // pred_check_branch
      %467 = sbr.rel (0) target = $region25
    $region24: #{tpu_custom_call.1} parent=1 // pred_region
      %468 = dma.done [#allocation4], 128
    $region25: #{tpu_custom_call.1} parent=1 // pred_fallthru
      _
    %469 = vsyncpa [#allocation3], 1
    %470 = vsyncpa [#allocation4], 1

</llo_original>
